<compile_context>
chip_gen: v7x
topology: tpu7x:2x2x1
jax: 0.10.0
libtpu: 0.0.40
codegen_flags: <defaults>
</compile_context>

<pallas_src>
import jax
import jax.numpy as jnp
from jax.experimental import pallas as pl
from jax.experimental.pallas import tpu as pltpu


def _round_up(x, m):
    return ((x + m - 1) // m) * m


def _pick_tile_m(M, K, itemsize):
    """Row-tile size: ~2 MiB of X per step, >=2 grid steps when M allows, 8-aligned."""
    target_bytes = 2 * 1024 * 1024
    rows = max(8, target_bytes // max(1, K * itemsize))
    tile = min(2048, _round_up(rows, 8))
    if M >= 16:
        # Keep at least 2 parallel grid steps so both v7x TensorCores get work.
        tile = min(tile, _round_up((M + 1) // 2, 8))
    tile = min(tile, _round_up(M, 8))
    return max(8, tile)


def nsp_kernel(x_ref, w_ref, b_ref, o_ref):
    # x_ref: (tile_m, K) row tile; w_ref: (K, N); b_ref: (1, N); o_ref: (tile_m, N)
    # Inputs stay in native dtype; accumulate in f32 on the MXU.
    y = jnp.dot(x_ref[...], w_ref[...], preferred_element_type=jnp.float32)
    o_ref[...] = (y + b_ref[...]).astype(o_ref.dtype)


def next_sentence_pred_forward(X, weight, bias):
    """Equivalent of NextSentencePred.forward(X) = X @ weight.T + bias.

    X:      (..., num_inputs)
    weight: (num_outputs, num_inputs)   (PyTorch nn.Linear layout)
    bias:   (num_outputs,)
    """
    *lead, num_inputs = X.shape
    num_outputs = weight.shape[0]

    Xf = X.reshape(-1, num_inputs)
    M = Xf.shape[0]
    K = num_inputs
    N = num_outputs

    itemsize = jnp.dtype(X.dtype).itemsize
    tile_m = _pick_tile_m(M, K, itemsize)
    grid = (pl.cdiv(M, tile_m),)

    # Mixed-precision choice: weights follow the activation dtype (f32 in -> f32).
    Wt = weight.T.astype(X.dtype)                 # (K, N)
    b_2d = bias.reshape(1, N).astype(jnp.float32)  # added post-accumulation in f32

    # VMEM working set (double-buffered) + slack; stays far below per-TC VMEM.
    vmem_bytes = (
        2 * tile_m * K * itemsize        # X tiles (double-buffered)
        + 2 * K * N * itemsize           # W (constant block)
        + 2 * N * 4                      # bias
        + 2 * tile_m * N * itemsize      # output tiles
        + 4 * 1024 * 1024                # headroom for compiler scratch
    )
    vmem_limit = int(min(max(vmem_bytes, 8 * 1024 * 1024), 32 * 1024 * 1024))

    out = pl.pallas_call(
        nsp_kernel,
        out_shape=jax.ShapeDtypeStruct((M, N), X.dtype),
        grid_spec=pltpu.PrefetchScalarGridSpec(
            num_scalar_prefetch=0,
            grid=grid,
            in_specs=[
                pl.BlockSpec((tile_m, K), lambda i: (i, 0)),   # X row tile
                pl.BlockSpec((K, N), lambda i: (0, 0)),        # W: constant block
                pl.BlockSpec((1, N), lambda i: (0, 0)),        # bias: constant block
            ],
            out_specs=pl.BlockSpec((tile_m, N), lambda i: (i, 0)),
        ),
        compiler_params=pltpu.CompilerParams(
            dimension_semantics=("parallel",),   # row tiles shard across TCs
            vmem_limit_bytes=vmem_limit,
        ),
    )(Xf, Wt, b_2d)

    return out.reshape(*lead, num_outputs)


# Single jit over the whole wrapper: W/b prep is fused, no per-call dispatch churn.
nsp_forward = jax.jit(next_sentence_pred_forward)


def init_params(key, num_inputs, num_outputs=2):
    """nn.Linear(num_inputs, num_outputs) init: U(-1/sqrt(fan_in), 1/sqrt(fan_in))."""
    k1, k2 = jax.random.split(key)
    lim = 1.0 / (num_inputs ** 0.5)
    weight = jax.random.uniform(k1, (num_outputs, num_inputs), jnp.float32, -lim, lim)
    bias = jax.random.uniform(k2, (num_outputs,), jnp.float32, -lim, lim)
    return weight, bias


def next_sentence_pred_reference(X, weight, bias):
    """Pure-JAX reference of NextSentencePred.forward."""
    return X @ weight.T + bias


if __name__ == "__main__":
    key = jax.random.PRNGKey(0)
    kx1, kx2, kw = jax.random.split(key, 3)

    num_inputs = 128
    weight, bias = init_params(kw, num_inputs, 2)

    # Case 1: batch of pooled CLS vectors; M=200 is NOT a multiple of tile_m, so
    # this exercises Pallas boundary-block masking (no wrapper-side padding).
    X1 = jax.random.normal(kx1, (200, num_inputs), jnp.float32)
    out1 = jax.block_until_ready(nsp_forward(X1, weight, bias))
    ref1 = next_sentence_pred_reference(X1, weight, bias)
    assert out1.shape == (200, 2)
    assert jnp.allclose(out1, ref1, atol=1e-4, rtol=1e-4), "case1 mismatch vs reference"

    # Case 2: small 3-D input; exercises the reshape glue and tiny-M tiling.
    X2 = jax.random.normal(kx2, (2, 8, num_inputs), jnp.float32)
    out2 = jax.block_until_ready(nsp_forward(X2, weight, bias))
    ref2 = next_sentence_pred_reference(X2, weight, bias)
    assert out2.shape == (2, 8, 2)
    assert jnp.allclose(out2, ref2, atol=1e-4, rtol=1e-4), "case2 mismatch vs reference"

    print("KERNEL_OK")
</pallas_src>

<mosaic_0001>
module attributes {stable_mosaic.version = 11 : i64} {
  func.func @nsp_kernel(%arg0: i32, %arg1: memref<104x128xf32, #tpu.memory_space<vmem>>, %arg2: memref<128x2xf32, #tpu.memory_space<vmem>>, %arg3: memref<1x2xf32, #tpu.memory_space<vmem>>, %arg4: memref<104x2xf32, #tpu.memory_space<vmem>>) attributes {dimension_semantics = [#tpu.dimension_semantics<parallel>], iteration_bounds = array<i64: 2>, scalar_prefetch = 0 : i64, scratch_operands = 0 : i64, tpu.core_type = #tpu.core_type<tc>, window_params = [{transform_indices = @transform_0, window_bounds = array<i64: 104, 128>}, {pipeline_mode = #tpu.pipeline_mode<synchronous>, transform_indices = @transform_1, window_bounds = array<i64: 128, 2>}, {pipeline_mode = #tpu.pipeline_mode<synchronous>, transform_indices = @transform_2, window_bounds = array<i64: 1, 2>}, {transform_indices = @transform_3, window_bounds = array<i64: 104, 2>}]} {
    %c0 = arith.constant 0 : index
    %c0_0 = arith.constant 0 : index
    %0 = vector.load %arg1[%c0, %c0_0] : memref<104x128xf32, #tpu.memory_space<vmem>>, vector<104x128xf32>
    %c0_1 = arith.constant 0 : index
    %c0_2 = arith.constant 0 : index
    %1 = vector.load %arg2[%c0_1, %c0_2] : memref<128x2xf32, #tpu.memory_space<vmem>>, vector<128x2xf32>
    %cst = arith.constant dense<0.000000e+00> : vector<104x2xf32>
    %2 = tpu.matmul %0, %1, %cst {dimension_numbers = #tpu.dot_dimension_numbers<[1], [0], [0], [1], [0, 0, 1, 1], [], []>} : vector<104x128xf32>, vector<128x2xf32>, vector<104x2xf32> -> vector<104x2xf32>
    %c0_3 = arith.constant 0 : index
    %c0_4 = arith.constant 0 : index
    %3 = vector.load %arg3[%c0_3, %c0_4] : memref<1x2xf32, #tpu.memory_space<vmem>>, vector<1x2xf32>
    %4 = vector.broadcast %3 : vector<1x2xf32> to vector<104x2xf32>
    %5 = arith.addf %2, %4 : vector<104x2xf32>
    %c0_5 = arith.constant 0 : index
    %c0_6 = arith.constant 0 : index
    %6 = vector.load %arg4[%c0_5, %c0_6] : memref<104x2xf32, #tpu.memory_space<vmem>>, vector<104x2xf32>
    tpu.vector_store %arg4[%c0_5, %c0_6], %5 {strides = array<i32>} : memref<104x2xf32, #tpu.memory_space<vmem>>, vector<104x2xf32>,
    return
  }
  func.func @transform_0(%arg0: i32) -> (i32, i32) {
    %c0_i32 = arith.constant 0 : i32
    %c0_i32_0 = arith.constant 0 : i32
    return %arg0, %c0_i32 : i32, i32
  }
  func.func @transform_1(%arg0: i32) -> (i32, i32) {
    %c0_i32 = arith.constant 0 : i32
    %c0_i32_0 = arith.constant 0 : i32
    %c0_i32_1 = arith.constant 0 : i32
    return %c0_i32, %c0_i32_0 : i32, i32
  }
  func.func @transform_2(%arg0: i32) -> (i32, i32) {
    %c0_i32 = arith.constant 0 : i32
    %c0_i32_0 = arith.constant 0 : i32
    %c0_i32_1 = arith.constant 0 : i32
    return %c0_i32, %c0_i32_0 : i32, i32
  }
  func.func @transform_3(%arg0: i32) -> (i32, i32) {
    %c0_i32 = arith.constant 0 : i32
    %c0_i32_0 = arith.constant 0 : i32
    return %arg0, %c0_i32 : i32, i32
  }
}

</mosaic_0001>

<llo_original>
// kernel: next_sentence_pred_forward.1
$region0: #{next_sentence_pred_forward.1}
  #allocation0 [shape = 'u32[]', space=smem, size = 0x4, offset = 0x4, fixed_abs, tag = 'smem constant byte address 0x4 - core index']
  #allocation1 [shape = 'u32[144,128]{1,0:T(1,128)}', space=vmem, size = 0x12000, scoped, tag = 'internal scratch']
  %s0 = inlined_call_operand.hbm [shape: f32[200,128], index: 0, kind: input, shape index: {}]
  %s1 = inlined_call_operand.vmem [shape: f32[128,2], index: 1, kind: input, shape index: {}]
  %s2 = inlined_call_operand.vmem [shape: f32[1,2], index: 2, kind: input, shape index: {}]
  %s3 = inlined_call_operand.vmem [shape: f32[200,2], index: 3, kind: output, shape index: {}]
  %s4 = sld [smem:[#allocation0]]
  $region97: #{next_sentence_pred_forward.1} parent=0
    _
  %s6 = ssub.s32 1, %s4
  %s7 = scalar_select 0, %s6, %s4
  $region1: #{next_sentence_pred_forward.1} parent=0
    #allocation2 [shape = 'u8[106496]{0}', space=vmem, size = 0x1a000, scoped, tag = 'input window, operand 0']
    #allocation3 [shape = 's32[2]{0}', space=sflag, size = 0x8, scoped, tag = 'scoped memory for next_sentence_pred_forward.1']
    #allocation4 [shape = 'u8[106496]{0}', space=vmem, size = 0x1a000, scoped, tag = 'output window, operand 0']
    %8 = vsyncpa [#allocation3], 0
    %s9 = scalar_lea.sflag [#allocation3], 1
    %10 = vsyncpa %s9, 0
    loop: start=0, step=1, limit=4
    $region2: #{next_sentence_pred_forward.1} parent=1 // loop_pre_header
      _
    $region3: #{next_sentence_pred_forward.1} parent=1 // loop_header
      %s12 = sphi 0, %s16
      %p13 = scmp.ge.s32.totalorder %s12, 4
      %s22 = sphi 0, %s24
      %s25 = sphi 0, %s22
      %s26 = sphi 0, %s25
      %s42 = sphi 0, %s26
      %s46 = sphi 0, %s46
      %s48 = sphi 0, %s46
      %s49 = sphi 0, %s48
      %s63 = sphi 0, %s49
      %s67 = sphi 0, %s67
      %s69 = sphi 0, %s67
      %s70 = sphi 0, %s69
      %s84 = sphi 0, %s70
      %s90 = sphi 0, %s92
      %s93 = sphi 0, %s90
      %s94 = sphi 0, %s93
      %s110 = sphi 0, %s94
    $region4: #{next_sentence_pred_forward.1} parent=1 // loop_header_branch
      %15 = sbr.rel (%p13) target = $region8
    $region5: #{next_sentence_pred_forward.1} parent=1 // loop_body
      %s17 = ssub.s32 %s12, 1
      %s18 = ssub.s32 %s12, 2
      %s19 = sadd.s32 %s12, 1
      %s20 = ssub.s32 %s12, %s19
      %p21 = scmp.eq.s32.totalorder %s20, 0
      %s23 = sadd.s32 %s22, 1
      %s24 = scalar_select %p21, %s22, %s23
      %p27 = pneg %p21
      %p28 = scmp.eq.s32.totalorder %s12, 1
      %p29 = por %p27, %p28
      %p30 = scmp.ne.s32.totalorder %s22, %s25
      %p31 = scmp.eq.s32.totalorder %s12, 0
      %p32 = por %p30, %p31
      %p33 = scmp.ne.s32.totalorder %s22, %s25
      %p34 = scmp.eq.s32.totalorder %s17, 1
      %p35 = por %p33, %p34
      %p36 = scmp.ne.s32.totalorder %s25, %s26
      %p37 = scmp.eq.s32.totalorder %s17, 0
      %p38 = por %p36, %p37
      %p39 = scmp.ne.s32.totalorder %s25, %s26
      %p40 = scmp.eq.s32.totalorder %s18, 1
      %p41 = por %p39, %p40
      %p43 = scmp.ne.s32.totalorder %s26, %s42
      %p44 = scmp.eq.s32.totalorder %s18, 0
      %p45 = por %p43, %p44
      %s47 = sadd.s32 %s46, 1
      %p50 = scmp.eq.s32.totalorder %s12, 1
      %p51 = scmp.ne.s32.totalorder %s46, %s48
      %p52 = scmp.eq.s32.totalorder %s12, 0
      %p53 = por %p51, %p52
      %p54 = scmp.ne.s32.totalorder %s46, %s48
      %p55 = scmp.eq.s32.totalorder %s17, 1
      %p56 = por %p54, %p55
      %p57 = scmp.ne.s32.totalorder %s48, %s49
      %p58 = scmp.eq.s32.totalorder %s17, 0
      %p59 = por %p57, %p58
      %p60 = scmp.ne.s32.totalorder %s48, %s49
      %p61 = scmp.eq.s32.totalorder %s18, 1
      %p62 = por %p60, %p61
      %p64 = scmp.ne.s32.totalorder %s49, %s63
      %p65 = scmp.eq.s32.totalorder %s18, 0
      %p66 = por %p64, %p65
      %s68 = sadd.s32 %s67, 1
      %p71 = scmp.eq.s32.totalorder %s12, 1
      %p72 = scmp.ne.s32.totalorder %s67, %s69
      %p73 = scmp.eq.s32.totalorder %s12, 0
      %p74 = por %p72, %p73
      %p75 = scmp.ne.s32.totalorder %s67, %s69
      %p76 = scmp.eq.s32.totalorder %s17, 1
      %p77 = por %p75, %p76
      %p78 = scmp.ne.s32.totalorder %s69, %s70
      %p79 = scmp.eq.s32.totalorder %s17, 0
      %p80 = por %p78, %p79
      %p81 = scmp.ne.s32.totalorder %s69, %s70
      %p82 = scmp.eq.s32.totalorder %s18, 1
      %p83 = por %p81, %p82
      %p85 = scmp.ne.s32.totalorder %s70, %s84
      %p86 = scmp.eq.s32.totalorder %s18, 0
      %p87 = por %p85, %p86
      %s88 = ssub.s32 %s12, %s19
      %p89 = scmp.eq.s32.totalorder %s88, 0
      %s91 = sadd.s32 %s90, 1
      %s92 = scalar_select %p89, %s90, %s91
      %p95 = pneg %p89
      %p96 = scmp.eq.s32.totalorder %s12, 1
      %p97 = por %p95, %p96
      %p98 = scmp.ne.s32.totalorder %s90, %s93
      %p99 = scmp.eq.s32.totalorder %s12, 0
      %p100 = por %p98, %p99
      %p101 = scmp.ne.s32.totalorder %s90, %s93
      %p102 = scmp.eq.s32.totalorder %s17, 1
      %p103 = por %p101, %p102
      %p104 = scmp.ne.s32.totalorder %s93, %s94
      %p105 = scmp.eq.s32.totalorder %s17, 0
      %p106 = por %p104, %p105
      %p107 = scmp.ne.s32.totalorder %s93, %s94
      %p108 = scmp.eq.s32.totalorder %s18, 1
      %p109 = por %p107, %p108
      %p111 = scmp.ne.s32.totalorder %s94, %s110
      %p112 = scmp.eq.s32.totalorder %s18, 0
      %p113 = por %p111, %p112
      %p114 = scmp.le.s32.totalorder 1, %s12
      %p115 = scmp.lt.s32.totalorder %s12, 3
      %p116 = pnand %p114, %p115
      %p117 = pneg %p116
      // Predicated region
      $region9: #{next_sentence_pred_forward.1} parent=5 // pred_check
        _
      $region10: #{next_sentence_pred_forward.1} parent=5 // pred_check_branch
        %119 = sbr.rel (%p116) target = $region12
      $region11: #{next_sentence_pred_forward.1} parent=5 // pred_region
        %s120 = ssub.s32 %s12, 1
        // Predicated region
        $region13: #{next_sentence_pred_forward.1} parent=11 // pred_check
          %p121 = pneg %p59
        $region14: #{next_sentence_pred_forward.1} parent=11 // pred_check_branch
          %123 = sbr.rel (%p121) target = $region16
        $region15: #{next_sentence_pred_forward.1} parent=11 // pred_region
          _
        $region16: #{next_sentence_pred_forward.1} parent=11 // pred_fallthru
          _
        // Predicated region
        $region17: #{next_sentence_pred_forward.1} parent=11 // pred_check
          %p124 = pneg %p80
        $region18: #{next_sentence_pred_forward.1} parent=11 // pred_check_branch
          %126 = sbr.rel (%p124) target = $region20
        $region19: #{next_sentence_pred_forward.1} parent=11 // pred_region
          _
        $region20: #{next_sentence_pred_forward.1} parent=11 // pred_fallthru
          _
      $region12: #{next_sentence_pred_forward.1} parent=5 // pred_fallthru
        _
      %p127 = scmp.lt.s32.totalorder %s12, 2
      // Predicated region
      $region21: #{next_sentence_pred_forward.1} parent=5 // pred_check
        %p128 = pneg %p127
      $region22: #{next_sentence_pred_forward.1} parent=5 // pred_check_branch
        %130 = sbr.rel (%p128) target = $region24
      $region23: #{next_sentence_pred_forward.1} parent=5 // pred_region
        // Predicated region
        $region25: #{next_sentence_pred_forward.1} parent=23 // pred_check
          %p131 = pneg %p32
        $region26: #{next_sentence_pred_forward.1} parent=23 // pred_check_branch
          %133 = sbr.rel (%p131) target = $region28
        $region27: #{next_sentence_pred_forward.1} parent=23 // pred_region
          %s134 = sand.u32 %s22, 1
          %s135 = scalar_lea.sflag [#allocation3], %s134
          %s136 = sand.u32 %s22, 1
          %s137 = smul.addr %s136, 104
          %s138 = scalar_lea.vmem [#allocation2], %s137
          %s139 = smul.u32 13, %s12
          %s140 = ssub.s32 25, %s139
          %p141 = scmp.lt.s32.totalorder %s140, 13
          %s142 = scalar_select %p141, %s140, 13
          %s143 = smul.u32 128, %s142
          %s145 = ssub.s32 1664, %s143
          %146 = vsyncadd %s135, %s145
          %p147 = scmp.ne.s32.totalorder 0, %s143
          %s148 = smul.addr %s139, 128
          %s149 = scalar_lea.hbm %s0, %s148
          %s150 = smul.u32 8, %s142
          %s151 = sshll.u32 %s138, 4
          %s152 = int_to_ptr.vmem [resolvable:$true] %s151
          %s153 = sshll.u32 %s150, 4
          %157 = dma.hbm_to_vmem [thread:$0]  (%p147), %s149, %s153, %s152, %s135, 128, 128, 8
        $region28: #{next_sentence_pred_forward.1} parent=23 // pred_fallthru
          _
      $region24: #{next_sentence_pred_forward.1} parent=5 // pred_fallthru
        _
      %p158 = scmp.le.s32.totalorder 1, %s12
      %p159 = scmp.lt.s32.totalorder %s12, 3
      %p160 = pnand %p158, %p159
      %p161 = pneg %p160
      // Predicated region
      $region29: #{next_sentence_pred_forward.1} parent=5 // pred_check
        _
      $region30: #{next_sentence_pred_forward.1} parent=5 // pred_check_branch
        %163 = sbr.rel (%p160) target = $region32
      $region31: #{next_sentence_pred_forward.1} parent=5 // pred_region
        %s164 = ssub.s32 %s12, 1
        %s165 = sand.u32 %s25, 1
        %s166 = scalar_lea.sflag [#allocation3], %s165
        %s167 = sand.u32 %s25, 1
        %s168 = smul.addr %s167, 104
        %s169 = scalar_lea.vmem [#allocation2], %s168
        // Predicated region
        $region33: #{next_sentence_pred_forward.1} parent=31 // pred_check
          %p170 = pneg %p38
        $region34: #{next_sentence_pred_forward.1} parent=31 // pred_check_branch
          %172 = sbr.rel (%p170) target = $region36
        $region35: #{next_sentence_pred_forward.1} parent=31 // pred_region
          %173 = dma.done %s166, 1664
        $region36: #{next_sentence_pred_forward.1} parent=31 // pred_fallthru
          _
        %s174 = sand.u32 %s25, 1
        %s175 = scalar_lea.sflag [#allocation3], %s174
        %s176 = sand.u32 %s25, 1
        %s177 = smul.addr %s176, 104
        %s178 = scalar_lea.vmem [#allocation2], %s177
        %p179 = pneg %p38
        %p180 = pneg %p35
        %p181 = pneg %p59
        %p182 = pneg %p56
        %p183 = pneg %p80
        %p184 = pneg %p77
        %p185 = pneg %p106
        %p186 = pneg %p103
        %s187 = sand.u32 %s93, 1
        %s188 = sand.u32 %s93, 1
        %s189 = smul.addr %s188, 104
        %s190 = scalar_lea.vmem [#allocation4], %s189
        %s191 = smul.u32 13, %s17
        %s192 = ssub.s32 25, %s191
        %p193 = scmp.lt.s32.totalorder %s192, 13
        %s194 = scalar_select %p193, %s192, 13
        %s195 = smul.u32 128, %s194
        %s196 = smul.u32 13, %s17
        %s197 = ssub.s32 25, %s196
        %p198 = scmp.lt.s32.totalorder %s197, 13
        %s199 = scalar_select %p198, %s197, 13
        %s200 = smul.u32 128, %s199
        %v201 = vld [vmem:[%s169] sm:$0xff]
        %v202 = vld [vmem:[%s169 + $0x8] sm:$0xff]
        %v203 = vld [vmem:[%s169 + $0x10] sm:$0xff]
        %v204 = vld [vmem:[%s169 + $0x18] sm:$0xff]
        %v205 = vld [vmem:[%s169 + $0x20] sm:$0xff]
        %v206 = vld [vmem:[%s169 + $0x28] sm:$0xff]
        %v207 = vld [vmem:[%s169 + $0x30] sm:$0xff]
        %v208 = vld [vmem:[%s169 + $0x38] sm:$0xff]
        %v209 = vld [vmem:[%s169 + $0x40] sm:$0xff]
        %v210 = vld [vmem:[%s169 + $0x48] sm:$0xff]
        %v211 = vld [vmem:[%s169 + $0x50] sm:$0xff]
        %v212 = vld [vmem:[%s169 + $0x58] sm:$0xff]
        %v213 = vld [vmem:[%s169 + $0x60] sm:$0xff]
        %v214 = vld [vmem:[%s1] sm:$0xff]
        %v215 = vld [vmem:[%s1 + $0x8] sm:$0xff]
        %v216 = vld [vmem:[%s1 + $0x10] sm:$0xff]
        %v217 = vld [vmem:[%s1 + $0x18] sm:$0xff]
        %v218 = vld [vmem:[%s1 + $0x20] sm:$0xff]
        %v219 = vld [vmem:[%s1 + $0x28] sm:$0xff]
        %v220 = vld [vmem:[%s1 + $0x30] sm:$0xff]
        %v221 = vld [vmem:[%s1 + $0x38] sm:$0xff]
        %v222 = vld [vmem:[%s1 + $0x40] sm:$0xff]
        %v223 = vld [vmem:[%s1 + $0x48] sm:$0xff]
        %v224 = vld [vmem:[%s1 + $0x50] sm:$0xff]
        %v225 = vld [vmem:[%s1 + $0x58] sm:$0xff]
        %v226 = vld [vmem:[%s1 + $0x60] sm:$0xff]
        %v227 = vld [vmem:[%s1 + $0x68] sm:$0xff]
        %v228 = vld [vmem:[%s1 + $0x70] sm:$0xff]
        %v229 = vld [vmem:[%s1 + $0x78] sm:$0xff]
        %v230 = vld [vmem:[%s2] sm:$0x1]
        %v232 = vlaneseq
        %v233 = vshrl.u32 %v232, 7
        %v234 = vsub.s32 0, %v233
        %v235 = vrot.slane %v230, %v234
        %237 = vmatprep.subr.mxu0 0.0
        %238 = vmatpush1.msra.mxu0 %v214
        %239 = vmatprep.subr.mxu0 0.0
        %240 = vmatpush1.msra.mxu0 %v215
        %241 = vmatprep.subr.mxu0 0.0
        %242 = vmatpush1.msra.mxu0 %v216
        %243 = vmatprep.subr.mxu0 0.0
        %244 = vmatpush1.msra.mxu0 %v217
        %245 = vmatprep.subr.mxu0 0.0
        %246 = vmatpush1.msra.mxu0 %v218
        %247 = vmatprep.subr.mxu0 0.0
        %248 = vmatpush1.msra.mxu0 %v219
        %249 = vmatprep.subr.mxu0 0.0
        %250 = vmatpush1.msra.mxu0 %v220
        %251 = vmatprep.subr.mxu0 0.0
        %252 = vmatpush1.msra.mxu0 %v221
        %253 = vmatprep.subr.mxu0 0.0
        %254 = vmatpush1.msra.mxu0 %v222
        %255 = vmatprep.subr.mxu0 0.0
        %256 = vmatpush1.msra.mxu0 %v223
        %257 = vmatprep.subr.mxu0 0.0
        %258 = vmatpush1.msra.mxu0 %v224
        %259 = vmatprep.subr.mxu0 0.0
        %260 = vmatpush1.msra.mxu0 %v225
        %261 = vmatprep.subr.mxu0 0.0
        %262 = vmatpush1.msra.mxu0 %v226
        %263 = vmatprep.subr.mxu0 0.0
        %264 = vmatpush1.msra.mxu0 %v227
        %265 = vmatprep.subr.mxu0 0.0
        %266 = vmatpush1.msra.mxu0 %v228
        %267 = vmatprep.subr.mxu0 0.0
        %268 = vmatpush1.msra.mxu0 %v229
        %269 = vmatprep.subr.mxu0 0.0
        %270 = vmatpush1.msra.mxu0 0.0
        %271 = vmatprep.subr.mxu0 0.0
        %272 = vmatpush1.msra.mxu0 0.0
        %273 = vmatprep.subr.mxu0 0.0
        %274 = vmatpush1.msra.mxu0 0.0
        %275 = vmatprep.subr.mxu0 0.0
        %276 = vmatpush1.msra.mxu0 0.0
        %277 = vmatprep.subr.mxu0 0.0
        %278 = vmatpush1.msra.mxu0 0.0
        %279 = vmatprep.subr.mxu0 0.0
        %280 = vmatpush1.msra.mxu0 0.0
        %281 = vmatprep.subr.mxu0 0.0
        %282 = vmatpush1.msra.mxu0 0.0
        %283 = vmatprep.subr.mxu0 0.0
        %284 = vmatpush1.msra.mxu0 0.0
        %285 = vmatprep.subr.mxu0 0.0
        %286 = vmatpush1.msra.mxu0 0.0
        %287 = vmatprep.subr.mxu0 0.0
        %288 = vmatpush1.msra.mxu0 0.0
        %289 = vmatprep.subr.mxu0 0.0
        %290 = vmatpush1.msra.mxu0 0.0
        %291 = vmatprep.subr.mxu0 0.0
        %292 = vmatpush1.msra.mxu0 0.0
        %293 = vmatprep.subr.mxu0 0.0
        %294 = vmatpush1.msra.mxu0 0.0
        %295 = vmatprep.subr.mxu0 0.0
        %296 = vmatpush1.msra.mxu0 0.0
        %297 = vmatprep.subr.mxu0 0.0
        %298 = vmatpush1.msra.mxu0 0.0
        %299 = vmatprep.subr.mxu0 0.0
        %300 = vmatpush1.msra.mxu0 0.0
        %301 = vmatprep.mubr.f32.mxu0 0.0
        %302 = vmatmul.mubr.f32.gmra.mrb[0].mxu0 %v201
        %v303 = vpop.f32.mrb[0].mxu0
        %v304 = vadd.f32 %v235, %v303
        %v305 = vpop.f32.mrb[0].mxu0
        %306 = vmatprep.mubr.f32.mxu0 0.0
        %307 = vmatmul.mubr.f32.gmra.mrb[0].mxu0 %v202
        %v308 = vpop.f32.mrb[0].mxu0
        %v309 = vadd.f32 %v235, %v308
        %v310 = vpop.f32.mrb[0].mxu0
        %311 = vmatprep.mubr.f32.mxu0 0.0
        %312 = vmatmul.mubr.f32.gmra.mrb[0].mxu0 %v203
        %v313 = vpop.f32.mrb[0].mxu0
        %v314 = vadd.f32 %v235, %v313
        %v315 = vpop.f32.mrb[0].mxu0
        %316 = vmatprep.mubr.f32.mxu0 0.0
        %317 = vmatmul.mubr.f32.gmra.mrb[0].mxu0 %v204
        %v318 = vpop.f32.mrb[0].mxu0
        %v319 = vadd.f32 %v235, %v318
        %v320 = vpop.f32.mrb[0].mxu0
        %321 = vmatprep.mubr.f32.mxu0 0.0
        %322 = vmatmul.mubr.f32.gmra.mrb[0].mxu0 %v205
        %v323 = vpop.f32.mrb[0].mxu0
        %v324 = vadd.f32 %v235, %v323
        %v325 = vpop.f32.mrb[0].mxu0
        %326 = vmatprep.mubr.f32.mxu0 0.0
        %327 = vmatmul.mubr.f32.gmra.mrb[0].mxu0 %v206
        %v328 = vpop.f32.mrb[0].mxu0
        %v329 = vadd.f32 %v235, %v328
        %v330 = vpop.f32.mrb[0].mxu0
        %331 = vmatprep.mubr.f32.mxu0 0.0
        %332 = vmatmul.mubr.f32.gmra.mrb[0].mxu0 %v207
        %v333 = vpop.f32.mrb[0].mxu0
        %v334 = vadd.f32 %v235, %v333
        %v335 = vpop.f32.mrb[0].mxu0
        %336 = vmatprep.mubr.f32.mxu0 0.0
        %337 = vmatmul.mubr.f32.gmra.mrb[0].mxu0 %v208
        %v338 = vpop.f32.mrb[0].mxu0
        %v339 = vadd.f32 %v235, %v338
        %v340 = vpop.f32.mrb[0].mxu0
        %341 = vmatprep.mubr.f32.mxu0 0.0
        %342 = vmatmul.mubr.f32.gmra.mrb[0].mxu0 %v209
        %v343 = vpop.f32.mrb[0].mxu0
        %v344 = vadd.f32 %v235, %v343
        %v345 = vpop.f32.mrb[0].mxu0
        %346 = vmatprep.mubr.f32.mxu0 0.0
        %347 = vmatmul.mubr.f32.gmra.mrb[0].mxu0 %v210
        %v348 = vpop.f32.mrb[0].mxu0
        %v349 = vadd.f32 %v235, %v348
        %v350 = vpop.f32.mrb[0].mxu0
        %351 = vmatprep.mubr.f32.mxu0 0.0
        %352 = vmatmul.mubr.f32.gmra.mrb[0].mxu0 %v211
        %v353 = vpop.f32.mrb[0].mxu0
        %v354 = vadd.f32 %v235, %v353
        %v355 = vpop.f32.mrb[0].mxu0
        %356 = vmatprep.mubr.f32.mxu0 0.0
        %357 = vmatmul.mubr.f32.gmra.mrb[0].mxu0 %v212
        %v358 = vpop.f32.mrb[0].mxu0
        %v359 = vadd.f32 %v235, %v358
        %v360 = vpop.f32.mrb[0].mxu0
        %361 = vmatprep.mubr.f32.mxu0 0.0
        %362 = vmatmul.mubr.f32.gmra.mrb[0].mxu0 %v213
        %v363 = vpop.f32.mrb[0].mxu0
        %v364 = vadd.f32 %v235, %v363
        %v365 = vpop.f32.mrb[0].mxu0
        %366 = vdwg.mxu0
        %vm367 = vcmask 15360
        %368 = vst.msk [vmem:[%s190] sm:$0xff] %vm367, %v304
        %369 = vst.msk [vmem:[%s190 + $0x8] sm:$0xff] %vm367, %v309
        %370 = vst.msk [vmem:[%s190 + $0x10] sm:$0xff] %vm367, %v314
        %371 = vst.msk [vmem:[%s190 + $0x18] sm:$0xff] %vm367, %v319
        %372 = vst.msk [vmem:[%s190 + $0x20] sm:$0xff] %vm367, %v324
        %373 = vst.msk [vmem:[%s190 + $0x28] sm:$0xff] %vm367, %v329
        %374 = vst.msk [vmem:[%s190 + $0x30] sm:$0xff] %vm367, %v334
        %375 = vst.msk [vmem:[%s190 + $0x38] sm:$0xff] %vm367, %v339
        %376 = vst.msk [vmem:[%s190 + $0x40] sm:$0xff] %vm367, %v344
        %377 = vst.msk [vmem:[%s190 + $0x48] sm:$0xff] %vm367, %v349
        %378 = vst.msk [vmem:[%s190 + $0x50] sm:$0xff] %vm367, %v354
        %379 = vst.msk [vmem:[%s190 + $0x58] sm:$0xff] %vm367, %v359
        %380 = vst.msk [vmem:[%s190 + $0x60] sm:$0xff] %vm367, %v364
        %s381 = sand.u32 %s93, 1
        %s382 = sand.u32 %s93, 1
        %s383 = smul.addr %s382, 104
        %s384 = scalar_lea.vmem [#allocation4], %s383
        // Predicated region
        $region37: #{next_sentence_pred_forward.1} parent=31 // pred_check
          %p385 = pneg %p103
        $region38: #{next_sentence_pred_forward.1} parent=31 // pred_check_branch
          %387 = sbr.rel (%p385) target = $region40
        $region39: #{next_sentence_pred_forward.1} parent=31 // pred_region
          %s388 = smul.u32 13, %s17
          %s389 = ssub.s32 25, %s388
          %p390 = scmp.lt.s32.totalorder %s389, 13
          %s391 = scalar_select %p390, %s389, 13
          %s392 = smul.u32 128, %s391
          %p393 = scmp.ne.s32.totalorder 0, %s392
          %s394 = smul.addr %s388, 8
          %s395 = scalar_lea.vmem %s3, %s394
          // Predicated region
          $region41: #{next_sentence_pred_forward.1} parent=39 // pred_check
            %p396 = pneg %p393
          $region42: #{next_sentence_pred_forward.1} parent=39 // pred_check_branch
            %398 = sbr.rel (%p396) target = $region44
          $region43: #{next_sentence_pred_forward.1} parent=39 // pred_region
            // Predicated region
            $region45: #{next_sentence_pred_forward.1} parent=43 // pred_check
              _
            $region46: #{next_sentence_pred_forward.1} parent=43 // pred_check_branch
              %400 = sbr.rel (0) target = $region48
            $region47: #{next_sentence_pred_forward.1} parent=43 // pred_region
              // Predicated region
              $region67: #{next_sentence_pred_forward.1} parent=47 // pred_check
                _
              $region68: #{next_sentence_pred_forward.1} parent=47 // pred_check_branch
                %474 = sbr.rel (0) target = $region70
              $region69: #{next_sentence_pred_forward.1} parent=47 // pred_region
                %s475 = sdiv.u32.pop %s391, 13
                %s476 = srem.u32.pop %s391, 13
                // While loop
                $region71: #{next_sentence_pred_forward.1} parent=69 // loop_pre_header
                  _
                $region72: #{next_sentence_pred_forward.1} parent=69 // loop_header
                  %s478 = sphi 0, %s480
                  %p479 = scmp.ge.s32.totalorder %s478, %s475
                  %s483 = sphi 0, %s514
                  %s484 = sphi %s384, %s517
                  %s485 = sphi %s395, %s518
                $region73: #{next_sentence_pred_forward.1} parent=69 // loop_header_branch
                  %482 = sbr.rel (%p479) target = $region77
                $region74: #{next_sentence_pred_forward.1} parent=69 // loop_body
                  %v486 = vld [vmem:[%s484] sm:$0xff]
                  %487 = vst [vmem:[%s485] sm:$0xff] %v486
                  %v488 = vld [vmem:[%s484 + $0x8] sm:$0xff]
                  %489 = vst [vmem:[%s485 + $0x8] sm:$0xff] %v488
                  %v490 = vld [vmem:[%s484 + $0x10] sm:$0xff]
                  %491 = vst [vmem:[%s485 + $0x10] sm:$0xff] %v490
                  %v492 = vld [vmem:[%s484 + $0x18] sm:$0xff]
                  %493 = vst [vmem:[%s485 + $0x18] sm:$0xff] %v492
                  %v494 = vld [vmem:[%s484 + $0x20] sm:$0xff]
                  %495 = vst [vmem:[%s485 + $0x20] sm:$0xff] %v494
                  %v496 = vld [vmem:[%s484 + $0x28] sm:$0xff]
                  %497 = vst [vmem:[%s485 + $0x28] sm:$0xff] %v496
                  %v498 = vld [vmem:[%s484 + $0x30] sm:$0xff]
                  %499 = vst [vmem:[%s485 + $0x30] sm:$0xff] %v498
                  %v500 = vld [vmem:[%s484 + $0x38] sm:$0xff]
                  %501 = vst [vmem:[%s485 + $0x38] sm:$0xff] %v500
                  %v502 = vld [vmem:[%s484 + $0x40] sm:$0xff]
                  %503 = vst [vmem:[%s485 + $0x40] sm:$0xff] %v502
                  %v504 = vld [vmem:[%s484 + $0x48] sm:$0xff]
                  %505 = vst [vmem:[%s485 + $0x48] sm:$0xff] %v504
                  %v506 = vld [vmem:[%s484 + $0x50] sm:$0xff]
                  %507 = vst [vmem:[%s485 + $0x50] sm:$0xff] %v506
                  %v508 = vld [vmem:[%s484 + $0x58] sm:$0xff]
                  %509 = vst [vmem:[%s485 + $0x58] sm:$0xff] %v508
                  %v510 = vld [vmem:[%s484 + $0x60] sm:$0xff]
                  %511 = vst [vmem:[%s485 + $0x60] sm:$0xff] %v510
                  %s512 = sadd.s32 1, %s483
                  %p513 = scmp.ge.s32.totalorder %s512, %s475
                  %s514 = scalar_select %p513, 0, %s512
                  %s515 = smul.u32 %s514, 104
                  %s516 = smul.u32 %s514, 104
                  %s517 = scalar_lea.vmem %s384, %s515 [#allocation4]
                  %s518 = scalar_lea.vmem %s395, %s516
                $region75: #{next_sentence_pred_forward.1} parent=69 // loop_footer
                  %s480 = sadd.s32 %s478, 1
                $region76: #{next_sentence_pred_forward.1} parent=69 // loop_footer_branch
                  %477 = sbr.rel target = $region72
                $region77: #{next_sentence_pred_forward.1} parent=69 // loop_exit
                  _
                %s519 = sdiv.u32.pop %s391, 13
                %s520 = srem.u32.pop %s391, 13
                %s521 = smul.u32 %s519, 13
                %s522 = smul.u32 8, %s521
                %s523 = scalar_lea.vmem %s384, %s522 [#allocation4]
                %s524 = smul.u32 8, %s521
                %s525 = scalar_lea.vmem %s395, %s524
                // While loop
                $region78: #{next_sentence_pred_forward.1} parent=69 // loop_pre_header
                  _
                $region79: #{next_sentence_pred_forward.1} parent=69 // loop_header
                  %s527 = sphi 0, %s529
                  %p528 = scmp.ge.s32.totalorder %s527, %s520
                  %s532 = sphi 0, %s539
                  %s533 = sphi %s523, %s542
                  %s534 = sphi %s525, %s543
                $region80: #{next_sentence_pred_forward.1} parent=69 // loop_header_branch
                  %531 = sbr.rel (%p528) target = $region84
                $region81: #{next_sentence_pred_forward.1} parent=69 // loop_body
                  %v535 = vld [vmem:[%s533] sm:$0xff]
                  %536 = vst [vmem:[%s534] sm:$0xff] %v535
                  %s537 = sadd.s32 1, %s532
                  %p538 = scmp.ge.s32.totalorder %s537, %s520
                  %s539 = scalar_select %p538, 0, %s537
                  %s540 = smul.u32 %s539, 8
                  %s541 = smul.u32 %s539, 8
                  %s542 = scalar_lea.vmem %s523, %s540 [#allocation4]
                  %s543 = scalar_lea.vmem %s525, %s541
                $region82: #{next_sentence_pred_forward.1} parent=69 // loop_footer
                  %s529 = sadd.s32 %s527, 1
                $region83: #{next_sentence_pred_forward.1} parent=69 // loop_footer_branch
                  %526 = sbr.rel target = $region79
                $region84: #{next_sentence_pred_forward.1} parent=69 // loop_exit
                  _
              $region70: #{next_sentence_pred_forward.1} parent=47 // pred_fallthru
                _
              // Predicated region
              $region85: #{next_sentence_pred_forward.1} parent=47 // pred_check
                _
              $region86: #{next_sentence_pred_forward.1} parent=47 // pred_check_branch
                %545 = sbr.rel target = $region88
              $region87: #{next_sentence_pred_forward.1} parent=47 // pred_region
                _
              $region88: #{next_sentence_pred_forward.1} parent=47 // pred_fallthru
                _
            $region48: #{next_sentence_pred_forward.1} parent=43 // pred_fallthru
              _
            // Predicated region
            $region49: #{next_sentence_pred_forward.1} parent=43 // pred_check
              _
            $region50: #{next_sentence_pred_forward.1} parent=43 // pred_check_branch
              %402 = sbr.rel target = $region52
            $region51: #{next_sentence_pred_forward.1} parent=43 // pred_region
              %s404 = sdiv.u32.pop %s391, 13
              %s405 = srem.u32.pop %s391, 13
              // While loop
              $region53: #{next_sentence_pred_forward.1} parent=51 // loop_pre_header
                _
              $region54: #{next_sentence_pred_forward.1} parent=51 // loop_header
                %s407 = sphi 0, %s409
                %p408 = scmp.ge.s32.totalorder %s407, %s404
                %s412 = sphi 0, %s443
                %s413 = sphi %s384, %s446
                %s414 = sphi %s395, %s447
              $region55: #{next_sentence_pred_forward.1} parent=51 // loop_header_branch
                %411 = sbr.rel (%p408) target = $region59
              $region56: #{next_sentence_pred_forward.1} parent=51 // loop_body
                %v415 = vld [vmem:[%s413] sm:$0xff]
                %416 = vst [vmem:[%s414] sm:$0xff] %v415
                %v417 = vld [vmem:[%s413 + $0x8] sm:$0xff]
                %418 = vst [vmem:[%s414 + $0x8] sm:$0xff] %v417
                %v419 = vld [vmem:[%s413 + $0x10] sm:$0xff]
                %420 = vst [vmem:[%s414 + $0x10] sm:$0xff] %v419
                %v421 = vld [vmem:[%s413 + $0x18] sm:$0xff]
                %422 = vst [vmem:[%s414 + $0x18] sm:$0xff] %v421
                %v423 = vld [vmem:[%s413 + $0x20] sm:$0xff]
                %424 = vst [vmem:[%s414 + $0x20] sm:$0xff] %v423
                %v425 = vld [vmem:[%s413 + $0x28] sm:$0xff]
                %426 = vst [vmem:[%s414 + $0x28] sm:$0xff] %v425
                %v427 = vld [vmem:[%s413 + $0x30] sm:$0xff]
                %428 = vst [vmem:[%s414 + $0x30] sm:$0xff] %v427
                %v429 = vld [vmem:[%s413 + $0x38] sm:$0xff]
                %430 = vst [vmem:[%s414 + $0x38] sm:$0xff] %v429
                %v431 = vld [vmem:[%s413 + $0x40] sm:$0xff]
                %432 = vst [vmem:[%s414 + $0x40] sm:$0xff] %v431
                %v433 = vld [vmem:[%s413 + $0x48] sm:$0xff]
                %434 = vst [vmem:[%s414 + $0x48] sm:$0xff] %v433
                %v435 = vld [vmem:[%s413 + $0x50] sm:$0xff]
                %436 = vst [vmem:[%s414 + $0x50] sm:$0xff] %v435
                %v437 = vld [vmem:[%s413 + $0x58] sm:$0xff]
                %438 = vst [vmem:[%s414 + $0x58] sm:$0xff] %v437
                %v439 = vld [vmem:[%s413 + $0x60] sm:$0xff]
                %440 = vst [vmem:[%s414 + $0x60] sm:$0xff] %v439
                %s441 = sadd.s32 1, %s412
                %p442 = scmp.ge.s32.totalorder %s441, %s404
                %s443 = scalar_select %p442, 0, %s441
                %s444 = smul.u32 %s443, 104
                %s445 = smul.u32 %s443, 104
                %s446 = scalar_lea.vmem %s384, %s444 [#allocation4]
                %s447 = scalar_lea.vmem %s395, %s445
              $region57: #{next_sentence_pred_forward.1} parent=51 // loop_footer
                %s409 = sadd.s32 %s407, 1
              $region58: #{next_sentence_pred_forward.1} parent=51 // loop_footer_branch
                %406 = sbr.rel target = $region54
              $region59: #{next_sentence_pred_forward.1} parent=51 // loop_exit
                _
              %s448 = sdiv.u32.pop %s391, 13
              %s449 = srem.u32.pop %s391, 13
              %s450 = smul.u32 %s448, 13
              %s451 = smul.u32 8, %s450
              %s452 = scalar_lea.vmem %s384, %s451 [#allocation4]
              %s453 = smul.u32 8, %s450
              %s454 = scalar_lea.vmem %s395, %s453
              // While loop
              $region60: #{next_sentence_pred_forward.1} parent=51 // loop_pre_header
                _
              $region61: #{next_sentence_pred_forward.1} parent=51 // loop_header
                %s456 = sphi 0, %s458
                %p457 = scmp.ge.s32.totalorder %s456, %s449
                %s461 = sphi 0, %s468
                %s462 = sphi %s452, %s471
                %s463 = sphi %s454, %s472
              $region62: #{next_sentence_pred_forward.1} parent=51 // loop_header_branch
                %460 = sbr.rel (%p457) target = $region66
              $region63: #{next_sentence_pred_forward.1} parent=51 // loop_body
                %v464 = vld [vmem:[%s462] sm:$0xff]
                %465 = vst [vmem:[%s463] sm:$0xff] %v464
                %s466 = sadd.s32 1, %s461
                %p467 = scmp.ge.s32.totalorder %s466, %s449
                %s468 = scalar_select %p467, 0, %s466
                %s469 = smul.u32 %s468, 8
                %s470 = smul.u32 %s468, 8
                %s471 = scalar_lea.vmem %s452, %s469 [#allocation4]
                %s472 = scalar_lea.vmem %s454, %s470
              $region64: #{next_sentence_pred_forward.1} parent=51 // loop_footer
                %s458 = sadd.s32 %s456, 1
              $region65: #{next_sentence_pred_forward.1} parent=51 // loop_footer_branch
                %455 = sbr.rel target = $region61
              $region66: #{next_sentence_pred_forward.1} parent=51 // loop_exit
                _
            $region52: #{next_sentence_pred_forward.1} parent=43 // pred_fallthru
              _
          $region44: #{next_sentence_pred_forward.1} parent=39 // pred_fallthru
            _
          %546 = vnop
        $region40: #{next_sentence_pred_forward.1} parent=31 // pred_fallthru
          _
      $region32: #{next_sentence_pred_forward.1} parent=5 // pred_fallthru
        _
      %p547 = scmp.le.s32.totalorder 2, %s12
      // Predicated region
      $region89: #{next_sentence_pred_forward.1} parent=5 // pred_check
        %p548 = pneg %p547
      $region90: #{next_sentence_pred_forward.1} parent=5 // pred_check_branch
        %550 = sbr.rel (%p548) target = $region92
      $region91: #{next_sentence_pred_forward.1} parent=5 // pred_region
        %s551 = ssub.s32 %s12, 2
        // Predicated region
        $region93: #{next_sentence_pred_forward.1} parent=91 // pred_check
          %p552 = pneg %p109
        $region94: #{next_sentence_pred_forward.1} parent=91 // pred_check_branch
          %554 = sbr.rel (%p552) target = $region96
        $region95: #{next_sentence_pred_forward.1} parent=91 // pred_region
          %s555 = sand.u32 %s94, 1
          %s556 = sand.u32 %s94, 1
          %s557 = smul.addr %s556, 104
          %s558 = scalar_lea.vmem [#allocation4], %s557
        $region96: #{next_sentence_pred_forward.1} parent=91 // pred_fallthru
          _
      $region92: #{next_sentence_pred_forward.1} parent=5 // pred_fallthru
        _
    $region6: #{next_sentence_pred_forward.1} parent=1 // loop_footer
      %s16 = sadd.s32 1, %s12
    $region7: #{next_sentence_pred_forward.1} parent=1 // loop_footer_branch
      %11 = sbr.rel target = $region3
    $region8: #{next_sentence_pred_forward.1} parent=1 // loop_exit
      _
    %559 = vsyncpa [#allocation3], 1
    %s560 = scalar_lea.sflag [#allocation3], 1
    %561 = vsyncpa %s560, 1

</llo_original>
